<compile_context>
chip_gen: v5e
topology: v5e:2x2
jax: 0.10.0
libtpu: 0.0.40
codegen_flags: <defaults>
</compile_context>

<pallas_src>
from functools import partial

import jax
import jax.numpy as jnp
from jax.experimental import pallas as pl
from jax.experimental.pallas import tpu as pltpu

_BLOCK_BYTES = 2 << 20   # ~2 MiB f32 per input block; in+out x double-buffer ~= 8 MiB VMEM


def _pact_kernel(clip_ref, x_ref, o_ref, *, nbits):
    # clip_ref: scalar-prefetched SMEM ref of shape (1,) holding the learned clip value.
    n = jnp.float32(2 ** nbits - 1)
    clip = jnp.maximum(clip_ref[0], jnp.float32(1e-8))    # guard against clip <= 0
    scale = n / clip                                       # asymmetric scale, sat_min = 0
    inv_scale = clip / n                                   # hoisted scalar reciprocal
    y = jnp.clip(x_ref[...], jnp.float32(0.0), clip)       # clamp(input, 0, clip_value)
    o_ref[...] = jnp.round(scale * y) * inv_scale          # quantize + dequantize


def _pick_lane(total):
    # Prefer the widest lane count that divides the flat size (no pad copy needed).
    for lane in (512, 256, 128):
        if total % lane == 0:
            return lane, False
    return 512, True     # fall back to zero padding with the widest lane


def pact_forward(x_nchw, clip_value, nbits=4):
    """x_nchw: float32 NCHW tensor. clip_value: float32 array of shape (1,)."""
    orig_shape = x_nchw.shape
    orig_dtype = x_nchw.dtype
    total = x_nchw.size

    lane, needs_pad = _pick_lane(total)
    elem_bytes = jnp.dtype(x_nchw.dtype).itemsize
    tile_r_max = max(8, _BLOCK_BYTES // (elem_bytes * lane))   # keep ~2 MiB blocks

    padded_total = pl.cdiv(total, lane) * lane
    rows = padded_total // lane
    if rows <= tile_r_max:
        tile_r = rows                                  # single block == full dim (layout OK)
    else:
        tile_r = tile_r_max                            # multiple of 8 by construction
        rows = pl.cdiv(rows, tile_r) * tile_r          # pad so the grid divides evenly
        padded_total = rows * lane

    x_flat = x_nchw.reshape(-1)
    if padded_total != total:
        x_flat = jnp.pad(x_flat, (0, padded_total - total))
    x2d = x_flat.reshape(rows, lane)

    grid = (rows // tile_r,)

    out2d = pl.pallas_call(
        partial(_pact_kernel, nbits=nbits),
        out_shape=jax.ShapeDtypeStruct((rows, lane), x2d.dtype),
        grid_spec=pltpu.PrefetchScalarGridSpec(
            num_scalar_prefetch=1,                     # clip_value lands in SMEM
            grid=grid,
            in_specs=[
                pl.BlockSpec((tile_r, lane), lambda i, clip: (i, 0)),
            ],
            out_specs=pl.BlockSpec((tile_r, lane), lambda i, clip: (i, 0)),
        ),
        compiler_params=pltpu.CompilerParams(
            dimension_semantics=("parallel",),         # shard row-tiles across TCs (v7x)
        ),
    )(clip_value, x2d)

    out_flat = out2d.reshape(-1)
    if padded_total != total:
        out_flat = out_flat[:total]
    return out_flat.reshape(orig_shape).astype(orig_dtype)


def pact_reference(x, clip_value, nbits=4):
    n = 2 ** nbits - 1
    c = jnp.maximum(clip_value[0], 1e-8)
    scale = n / c
    y = jnp.clip(x, 0.0, c)
    return jnp.round(scale * y) / scale


if __name__ == "__main__":
    key = jax.random.PRNGKey(0)

    # Case 1: the canonical small NCHW activation (flat size divisible by 512 -> no pad).
    x = jax.random.normal(key, (2, 4, 16, 16), dtype=jnp.float32)
    # PACT first-forward init: clip_value.data.copy_(input.max())
    clip_value = jnp.max(x).reshape(1).astype(jnp.float32)

    out = pact_forward(x, clip_value, nbits=4)
    out = jax.block_until_ready(out)
    ref = pact_reference(x, clip_value, nbits=4)
    assert out.shape == x.shape and out.dtype == x.dtype
    assert jnp.allclose(out, ref, atol=1e-5), "mismatch vs reference (case 1)"

    # Case 2: size NOT a multiple of 128 -> exercises the wrapper padding fallback.
    key2 = jax.random.PRNGKey(1)
    x2 = jax.random.normal(key2, (2, 3, 7, 5), dtype=jnp.float32)
    clip2 = jnp.max(x2).reshape(1).astype(jnp.float32)
    out2 = jax.block_until_ready(pact_forward(x2, clip2, nbits=4))
    ref2 = pact_reference(x2, clip2, nbits=4)
    assert out2.shape == x2.shape
    assert jnp.allclose(out2, ref2, atol=1e-5), "mismatch vs reference (case 2)"

    # Case 3: divisible by 128 but not 512 -> adaptive lane avoids any pad copy.
    key3 = jax.random.PRNGKey(2)
    x3 = jax.random.normal(key3, (2, 4, 4, 8), dtype=jnp.float32)   # 256 elements
    clip3 = jnp.max(x3).reshape(1).astype(jnp.float32)
    out3 = jax.block_until_ready(pact_forward(x3, clip3, nbits=4))
    ref3 = pact_reference(x3, clip3, nbits=4)
    assert out3.shape == x3.shape
    assert jnp.allclose(out3, ref3, atol=1e-5), "mismatch vs reference (case 3)"

    print("KERNEL_OK")
</pallas_src>

<mosaic_0001>
module attributes {stable_mosaic.version = 11 : i64} {
  func.func @_pact_kernel(%arg0: i32, %arg1: memref<1xf32, #tpu.memory_space<smem>>, %arg2: memref<4x512xf32, #tpu.memory_space<vmem>>, %arg3: memref<4x512xf32, #tpu.memory_space<vmem>>) attributes {dimension_semantics = [#tpu.dimension_semantics<parallel>], iteration_bounds = array<i64: 1>, scalar_prefetch = 1 : i64, scratch_operands = 0 : i64, tpu.core_type = #tpu.core_type<tc>, window_params = [{transform_indices = @transform_0, window_bounds = array<i64: 4, 512>}, {transform_indices = @transform_1, window_bounds = array<i64: 4, 512>}]} {
    %c0 = arith.constant 0 : index
    %0 = memref.load %arg1[%c0] : memref<1xf32, #tpu.memory_space<smem>>
    %cst = arith.constant 9.99999993E-9 : f32
    %1 = arith.maximumf %0, %cst : f32
    %cst_0 = arith.constant 1.500000e+01 : f32
    %2 = arith.divf %cst_0, %1 : f32
    %cst_1 = arith.constant 1.500000e+01 : f32
    %3 = arith.divf %1, %cst_1 : f32
    %c0_2 = arith.constant 0 : index
    %c0_3 = arith.constant 0 : index
    %4 = vector.load %arg2[%c0_2, %c0_3] : memref<4x512xf32, #tpu.memory_space<vmem>>, vector<4x512xf32>
    %cst_4 = arith.constant 0.000000e+00 : f32
    %5 = vector.broadcast %cst_4 : f32 to vector<4x512xf32>
    %6 = arith.maximumf %5, %4 : vector<4x512xf32>
    %7 = vector.broadcast %1 : f32 to vector<4x512xf32>
    %8 = arith.minimumf %7, %6 : vector<4x512xf32>
    %9 = vector.broadcast %2 : f32 to vector<4x512xf32>
    %10 = arith.mulf %9, %8 : vector<4x512xf32>
    %11 = math.roundeven %10 : vector<4x512xf32>
    %12 = vector.broadcast %3 : f32 to vector<4x512xf32>
    %13 = arith.mulf %11, %12 : vector<4x512xf32>
    %c0_5 = arith.constant 0 : index
    %c0_6 = arith.constant 0 : index
    %14 = vector.load %arg3[%c0_5, %c0_6] : memref<4x512xf32, #tpu.memory_space<vmem>>, vector<4x512xf32>
    tpu.vector_store %arg3[%c0_5, %c0_6], %13 {strides = array<i32>} : memref<4x512xf32, #tpu.memory_space<vmem>>, vector<4x512xf32>,
    return
  }
  func.func @transform_0(%arg0: i32, %arg1: memref<1xf32, #tpu.memory_space<smem>>) -> (i32, i32) {
    %c0_i32 = arith.constant 0 : i32
    %c0_i32_0 = arith.constant 0 : i32
    return %arg0, %c0_i32 : i32, i32
  }
  func.func @transform_1(%arg0: i32, %arg1: memref<1xf32, #tpu.memory_space<smem>>) -> (i32, i32) {
    %c0_i32 = arith.constant 0 : i32
    %c0_i32_0 = arith.constant 0 : i32
    return %arg0, %c0_i32 : i32, i32
  }
}

</mosaic_0001>

<llo_original>
// kernel: tpu_custom_call.1
$region0: #{tpu_custom_call.1}
  #allocation0 [shape = 'u32[]', space=smem, size = 0x4, offset = 0x4, fixed_abs, tag = 'smem constant byte address 0x4 - core index']
  #allocation1 [shape = 'u32[72,128]{1,0:T(1,128)}', space=vmem, size = 0x9000, scoped, tag = 'internal scratch']
  #allocation2 [shape = 's32[1]{0}', space=sflag, size = 0x4, scoped, tag = 'scoped memory for tpu_custom_call.1']
  #allocation3 [shape = 'f32[1]{0:T(128)S(6)}', space=smem, size = 0x200, scoped, tag = 'prefetched SMEM operand 0']
  %s0 = inlined_call_operand.<no memory space> [shape: f32[1], index: 0, kind: input, shape index: {}]
  %s1 = inlined_call_operand.hbm [shape: f32[4,512], index: 1, kind: input, shape index: {}]
  %s2 = inlined_call_operand.hbm [shape: f32[4,512], index: 2, kind: output, shape index: {}]
  %s3 = sld [smem:[#allocation0]]
  $region18: #{tpu_custom_call.1} parent=0
    _
  %s5 = ssub.s32 1, %s3
  %s6 = scalar_select 0, %s5, %s3
  %7 = sst [smem:[#allocation3]] %s0
  $region1: #{tpu_custom_call.1} parent=0
    #allocation4 [shape = 'u8[8192]{0}', space=vmem, size = 0x2000, scoped, tag = 'input window, operand 1, single buffered']
    #allocation5 [shape = 's32[1]{0}', space=sflag, size = 0x4, scoped, tag = 'scoped memory for tpu_custom_call.1']
    #allocation6 [shape = 's32[1]{0}', space=sflag, size = 0x4, scoped, tag = 'scoped memory for tpu_custom_call.1']
    #allocation7 [shape = 'u8[8192]{0}', space=vmem, size = 0x2000, scoped, tag = 'output window, operand 0, single buffered']
    %8 = vsyncpa [#allocation5], 0
    %9 = vsyncpa [#allocation6], 0
    // Predicated region
    $region2: #{tpu_custom_call.1} parent=1 // pred_check
      _
    $region3: #{tpu_custom_call.1} parent=1 // pred_check_branch
      %11 = sbr.rel (0) target = $region5
    $region4: #{tpu_custom_call.1} parent=1 // pred_region
      %13 = vsyncadd [#allocation5], 0
      %s15 = sshll.u32 %s1, 4
      %s16 = int_to_ptr.hbm [resolvable:$true] %s15
      %s17 = sshll.u32 [#allocation4], 4
      %s18 = int_to_ptr.vmem [resolvable:$true] %s17
      %20 = dma.hbm_to_vmem [thread:$0]  %s16, 256, %s18, [#allocation5]
    $region5: #{tpu_custom_call.1} parent=1 // pred_fallthru
      _
    // Predicated region
    $region6: #{tpu_custom_call.1} parent=1 // pred_check
      _
    $region7: #{tpu_custom_call.1} parent=1 // pred_check_branch
      %22 = sbr.rel (0) target = $region9
    $region8: #{tpu_custom_call.1} parent=1 // pred_region
      %24 = dma.done [#allocation5], 256
    $region9: #{tpu_custom_call.1} parent=1 // pred_fallthru
      _
    %s25 = sld [smem:[#allocation3]]
    %s26 = smax.f32 %s25, 1e-08
    %v27 = vstv %s26
    %v28 = vrcp.pop %v27
    %v29 = vmul.f32 %v27, %v28
    %v30 = vsub.f32 1.0, %v29
    %v31 = vmul.f32 %v28, %v30
    %v32 = vadd.f32 %v28, %v31
    %vm33 = vweird.f32 %v27
    %vm34 = vweird.f32 %v28
    %vm35 = vmor %vm33, %vm34
    %v36 = vsel %vm35, %v28, %v32
    %v37 = vand.u32 2147483647, %v27
    %vm38 = vcmp.eq.f32.partialorder %v37, 8.507059e+37
    %v39 = vand.u32 %v27, 2147483648
    %v40 = vor.u32 1.1754944e-38, %v39
    %v41 = vsel %vm38, %v40, %v36
    %s42 = vtos %v41
    %s43 = smul.f32 15.0, %s42
    %v44 = vrcp.pop 15.0
    %v45 = vmul.f32 15.0, %v44
    %v46 = vsub.f32 1.0, %v45
    %v47 = vmul.f32 %v44, %v46
    %v48 = vadd.f32 %v44, %v47
    %vm49 = vweird.f32 %v44
    %v50 = vsel %vm49, %v44, %v48
    %s51 = vtos %v50
    %s52 = smul.f32 %s26, %s51
    %v53 = vld [vmem:[#allocation4] sm:$0xff]
    %v54 = vld [vmem:[#allocation4 + $0x8] sm:$0xff]
    %v55 = vmax.f32 %v53, 0.0
    %v56 = vmax.f32 %v54, 0.0
    %v57 = vstv %s26
    %v58 = vmin.f32 %v57, %v55
    %v59 = vmin.f32 %v57, %v56
    %v60 = vstv %s43
    %v61 = vmul.f32 %v60, %v58
    %v62 = vmul.f32 %v60, %v59
    %v63 = vround.ne.pseudo %v61
    %v64 = vround.ne.pseudo %v62
    %v65 = vstv %s52
    %v66 = vmul.f32 %v63, %v65
    %v67 = vmul.f32 %v64, %v65
    %68 = vst [vmem:[#allocation7] sm:$0xff] %v66
    %69 = vst [vmem:[#allocation7 + $0x8] sm:$0xff] %v67
    // Predicated region
    $region10: #{tpu_custom_call.1} parent=1 // pred_check
      _
    $region11: #{tpu_custom_call.1} parent=1 // pred_check_branch
      %71 = sbr.rel (0) target = $region13
    $region12: #{tpu_custom_call.1} parent=1 // pred_region
      %73 = vsyncadd [#allocation6], 0
      %s75 = sshll.u32 [#allocation7], 4
      %s76 = int_to_ptr.vmem [resolvable:$true] %s75
      %s77 = sshll.u32 %s2, 4
      %s78 = int_to_ptr.hbm [resolvable:$true] %s77
      %80 = dma.vmem_to_hbm [thread:$0]  %s76, 256, %s78, [#allocation6]
    $region13: #{tpu_custom_call.1} parent=1 // pred_fallthru
      _
    // Predicated region
    $region14: #{tpu_custom_call.1} parent=1 // pred_check
      _
    $region15: #{tpu_custom_call.1} parent=1 // pred_check_branch
      %82 = sbr.rel (0) target = $region17
    $region16: #{tpu_custom_call.1} parent=1 // pred_region
      %84 = dma.done [#allocation6], 256
    $region17: #{tpu_custom_call.1} parent=1 // pred_fallthru
      _
    %85 = vsyncpa [#allocation5], 1
    %86 = vsyncpa [#allocation6], 1

</llo_original>
